<compile_context>
chip_gen: v7x
topology: tpu7x:2x2x1
jax: 0.10.0
libtpu: 0.0.40
codegen_flags: <defaults>
</compile_context>

<pallas_src>
import functools

import jax
import jax.numpy as jnp
from jax.experimental import pallas as pl
from jax.experimental.pallas import tpu as pltpu

K = 3              # conv kernel size
EPS = 1e-5         # BatchNorm2d default eps
SUBLANES = 8       # f32 sublane tile
VMEM_LIMIT = 32 * 1024 * 1024   # ample for the ~0.1 MiB per-step blocks here


def _conv_stats_kernel(x_ref, w_ref, mask_ref, conv_ref, psum_ref, pssq_ref,
                       col_sc, *, wp):
    """One image per grid step.

    x_ref:    (1, Cin, Hp*Wp)  bf16  zero-padded image, spatial flat on lanes
    w_ref:    (Cp8, 9*Cin)     bf16  im2col weight (Cout padded to 8 sublanes)
    mask_ref: (1, Hp*Wp)       f32   1.0 at the H*W valid positions, else 0.0
    conv_ref: (1, Cp8, Hp*Wp)  bf16  conv output (pre-BN)
    psum/pssq_ref: (1, Cp8, 1) f32   per-image BN partial sum / sum of squares
    col_sc:   (9*Cin, Hp*Wp)   bf16  im2col scratch
    """
    cin = x_ref.shape[1]
    hpwp = x_ref.shape[2]
    x = x_ref[0]                                    # (Cin, Hp*Wp) bf16

    # Build the im2col operand: tap (dy, dx) is the flattened padded image
    # shifted by off = (dy-1)*Wp + (dx-1) along the lane axis.  Out-of-range
    # lanes are zero; they only feed border output positions, which are masked
    # out of the statistics and sliced off in the wrapper.
    col_sc[...] = jnp.zeros_like(col_sc)
    t = 0
    for dy in range(K):
        for dx in range(K):
            off = (dy - 1) * wp + (dx - 1)
            if off >= 0:
                col_sc[t * cin:(t + 1) * cin, 0:hpwp - off] = x[:, off:hpwp]
            else:
                col_sc[t * cin:(t + 1) * cin, -off:hpwp] = x[:, 0:hpwp + off]
            t += 1

    # Single MXU matmul per image, bf16 inputs, f32 accumulation:
    # (Cp8, 9*Cin) @ (9*Cin, Hp*Wp) -> (Cp8, Hp*Wp).
    acc = jnp.dot(w_ref[...], col_sc[...], preferred_element_type=jnp.float32)

    # BN partial statistics straight from the f32 accumulator (no conv re-read);
    # the mask restricts them to the H*W valid pixels of this image.
    masked = acc * mask_ref[...]
    psum_ref[0] = jnp.sum(masked, axis=-1, keepdims=True)
    pssq_ref[0] = jnp.sum(masked * acc, axis=-1, keepdims=True)

    # Conv intermediate goes to HBM as bf16 (halves the writeback bytes).
    conv_ref[0] = acc.astype(conv_ref.dtype)


@jax.jit
def simple_dcn_forward(x_nchw, w_oihw, gamma, beta):
    """SimpleDCN forward. x_nchw: (N, Cin, H, W) f32 -> (N, Cout, H, W) f32."""
    N, Cin, H, W = x_nchw.shape
    Cout = w_oihw.shape[0]
    Hp, Wp = H + 2, W + 2
    HpWp = Hp * Wp
    Cp8 = ((Cout + SUBLANES - 1) // SUBLANES) * SUBLANES   # sublane-padded Cout

    # NCHW already puts channels on sublanes / spatial on lanes for this
    # kernel: zero-pad spatially, flatten padded spatial, cast to bf16.
    x_flat = jnp.pad(x_nchw, ((0, 0), (0, 0), (1, 1), (1, 1)))
    x_flat = x_flat.reshape(N, Cin, HpWp).astype(jnp.bfloat16)

    # (Cout, Cin, 3, 3) -> (Cp8, 9*Cin) with column index (dy*3+dx)*Cin + cin.
    w_lhs = jnp.transpose(w_oihw, (0, 2, 3, 1)).reshape(Cout, K * K * Cin)
    w_lhs = jnp.pad(w_lhs, ((0, Cp8 - Cout), (0, 0))).astype(jnp.bfloat16)

    # Valid-position mask over the flattened padded spatial axis.
    rows = jnp.arange(HpWp, dtype=jnp.int32) // Wp
    cols = jnp.arange(HpWp, dtype=jnp.int32) % Wp
    mask = ((rows >= 1) & (rows <= H) & (cols >= 1) & (cols <= W))
    mask = mask.astype(jnp.float32).reshape(1, HpWp)

    conv, psum, pssq = pl.pallas_call(
        functools.partial(_conv_stats_kernel, wp=Wp),
        grid=(N,),
        in_specs=[
            pl.BlockSpec((1, Cin, HpWp), lambda n: (n, 0, 0)),
            pl.BlockSpec((Cp8, K * K * Cin), lambda n: (0, 0)),
            pl.BlockSpec((1, HpWp), lambda n: (0, 0)),
        ],
        out_specs=(
            pl.BlockSpec((1, Cp8, HpWp), lambda n: (n, 0, 0)),
            pl.BlockSpec((1, Cp8, 1), lambda n: (n, 0, 0)),
            pl.BlockSpec((1, Cp8, 1), lambda n: (n, 0, 0)),
        ),
        out_shape=(
            jax.ShapeDtypeStruct((N, Cp8, HpWp), jnp.bfloat16),
            jax.ShapeDtypeStruct((N, Cp8, 1), jnp.float32),
            jax.ShapeDtypeStruct((N, Cp8, 1), jnp.float32),
        ),
        scratch_shapes=[pltpu.VMEM((K * K * Cin, HpWp), jnp.bfloat16)],
        compiler_params=pltpu.CompilerParams(
            dimension_semantics=("parallel",),     # megacore on v7x
            vmem_limit_bytes=VMEM_LIMIT),
    )(x_flat, w_lhs, mask)

    # Fused XLA epilogue: finalize GLOBAL BN stats (over N*H*W), fold into
    # scale/shift, apply + ReLU, drop channel padding and the spatial border.
    inv_count = 1.0 / (N * H * W)
    psum_c = psum[:, :Cout, 0]                       # (N, Cout)
    pssq_c = pssq[:, :Cout, 0]
    mean = jnp.sum(psum_c, axis=0) * inv_count
    var = jnp.maximum(jnp.sum(pssq_c, axis=0) * inv_count - mean * mean, 0.0)
    scale = gamma.astype(jnp.float32) * jax.lax.rsqrt(var + EPS)
    shift = beta.astype(jnp.float32) - mean * scale

    y = conv[:, :Cout, :].astype(jnp.float32)        # (N, Cout, Hp*Wp)
    y = jnp.maximum(y * scale[None, :, None] + shift[None, :, None], 0.0)
    return y.reshape(N, Cout, Hp, Wp)[:, :, 1:1 + H, 1:1 + W]


def _reference(x_nchw, w_oihw, gamma, beta):
    """Pure-JAX f32 reference (conv + training-mode BN + relu)."""
    conv = jax.lax.conv_general_dilated(
        x_nchw, w_oihw, window_strides=(1, 1), padding="SAME",
        dimension_numbers=("NCHW", "OIHW", "NCHW"))
    mean = conv.mean(axis=(0, 2, 3), keepdims=True)
    var = ((conv - mean) ** 2).mean(axis=(0, 2, 3), keepdims=True)
    y = (conv - mean) / jnp.sqrt(var + EPS)
    y = y * gamma[None, :, None, None] + beta[None, :, None, None]
    return jnp.maximum(y, 0.0)


if __name__ == "__main__":
    key = jax.random.PRNGKey(0)
    k_x, k_w, k_g, k_b = jax.random.split(key, 4)

    N, Cin, Cout, H, W = 2, 4, 4, 16, 16

    x = jax.random.normal(k_x, (N, Cin, H, W), dtype=jnp.float32)
    # Conv2d(in, out, 3, 1, 1, bias=False) weight: (Cout, Cin, 3, 3)
    fan_in = Cin * K * K
    w = jax.random.normal(k_w, (Cout, Cin, K, K), dtype=jnp.float32) / jnp.sqrt(fan_in)
    # BatchNorm2d affine params: (Cout,)
    gamma = 1.0 + 0.1 * jax.random.normal(k_g, (Cout,), dtype=jnp.float32)
    beta = 0.1 * jax.random.normal(k_b, (Cout,), dtype=jnp.float32)

    out = simple_dcn_forward(x, w, gamma, beta)
    out = jax.block_until_ready(out)

    ref = _reference(x, w, gamma, beta)
    assert out.shape == (N, Cout, H, W)
    # Tolerance loosened vs. pure f32 because MXU inputs and the conv
    # intermediate are bf16 (statistics and accumulation stay f32).
    max_err = float(jnp.max(jnp.abs(out - ref)))
    assert jnp.allclose(out, ref, rtol=5e-2, atol=5e-2), (
        f"mismatch vs JAX reference (max abs err {max_err})")

    print("KERNEL_OK")
</pallas_src>

<mosaic_0001>
module attributes {stable_mosaic.version = 11 : i64} {
  func.func @_conv_stats_kernel(%arg0: i32, %arg1: memref<1x4x324xbf16, #tpu.memory_space<vmem>>, %arg2: memref<8x36xbf16, #tpu.memory_space<vmem>>, %arg3: memref<1x324xf32, #tpu.memory_space<vmem>>, %arg4: memref<1x8x324xbf16, #tpu.memory_space<vmem>>, %arg5: memref<1x8x1xf32, #tpu.memory_space<vmem>>, %arg6: memref<1x8x1xf32, #tpu.memory_space<vmem>>, %arg7: memref<36x324xbf16, #tpu.memory_space<vmem>>) attributes {dimension_semantics = [#tpu.dimension_semantics<parallel>], iteration_bounds = array<i64: 2>, scalar_prefetch = 0 : i64, scratch_operands = 1 : i64, tpu.core_type = #tpu.core_type<tc>, window_params = [{transform_indices = @transform_0, window_bounds = array<i64: 1, 4, 324>}, {pipeline_mode = #tpu.pipeline_mode<synchronous>, transform_indices = @transform_1, window_bounds = array<i64: 8, 36>}, {pipeline_mode = #tpu.pipeline_mode<synchronous>, transform_indices = @transform_2, window_bounds = array<i64: 1, 324>}, {transform_indices = @transform_3, window_bounds = array<i64: 1, 8, 324>}, {transform_indices = @transform_4, window_bounds = array<i64: 1, 8, 1>}, {transform_indices = @transform_5, window_bounds = array<i64: 1, 8, 1>}]} {
    %c0 = arith.constant 0 : index
    %c0_0 = arith.constant 0 : index
    %c0_1 = arith.constant 0 : index
    %0 = vector.load %arg1[%c0, %c0_0, %c0_1] : memref<1x4x324xbf16, #tpu.memory_space<vmem>>, vector<1x4x324xbf16>
    %1 = vector.shape_cast %0 : vector<1x4x324xbf16> to vector<4x324xbf16>
    %cst = arith.constant 0.000000e+00 : bf16
    %2 = vector.broadcast %cst : bf16 to vector<36x324xbf16>
    %c0_2 = arith.constant 0 : index
    %c0_3 = arith.constant 0 : index
    %3 = vector.load %arg7[%c0_2, %c0_3] : memref<36x324xbf16, #tpu.memory_space<vmem>>, vector<36x324xbf16>
    tpu.vector_store %arg7[%c0_2, %c0_3], %2 {strides = array<i32>} : memref<36x324xbf16, #tpu.memory_space<vmem>>, vector<36x324xbf16>,
    %4 = vector.extract_strided_slice %1 {offsets = [0, 0], sizes = [4, 305], strides = [1, 1]} : vector<4x324xbf16> to vector<4x305xbf16>
    %c0_4 = arith.constant 0 : index
    %c19 = arith.constant 19 : index
    %5 = vector.load %arg7[%c0_4, %c19] : memref<36x324xbf16, #tpu.memory_space<vmem>>, vector<4x305xbf16>
    tpu.vector_store %arg7[%c0_4, %c19], %4 {strides = array<i32>} : memref<36x324xbf16, #tpu.memory_space<vmem>>, vector<4x305xbf16>,
    %6 = vector.extract_strided_slice %1 {offsets = [0, 0], sizes = [4, 306], strides = [1, 1]} : vector<4x324xbf16> to vector<4x306xbf16>
    %c4 = arith.constant 4 : index
    %c18 = arith.constant 18 : index
    %7 = vector.load %arg7[%c4, %c18] : memref<36x324xbf16, #tpu.memory_space<vmem>>, vector<4x306xbf16>
    tpu.vector_store %arg7[%c4, %c18], %6 {strides = array<i32>} : memref<36x324xbf16, #tpu.memory_space<vmem>>, vector<4x306xbf16>,
    %8 = vector.extract_strided_slice %1 {offsets = [0, 0], sizes = [4, 307], strides = [1, 1]} : vector<4x324xbf16> to vector<4x307xbf16>
    %c8 = arith.constant 8 : index
    %c17 = arith.constant 17 : index
    %9 = vector.load %arg7[%c8, %c17] : memref<36x324xbf16, #tpu.memory_space<vmem>>, vector<4x307xbf16>
    tpu.vector_store %arg7[%c8, %c17], %8 {strides = array<i32>} : memref<36x324xbf16, #tpu.memory_space<vmem>>, vector<4x307xbf16>,
    %10 = vector.extract_strided_slice %1 {offsets = [0, 0], sizes = [4, 323], strides = [1, 1]} : vector<4x324xbf16> to vector<4x323xbf16>
    %c12 = arith.constant 12 : index
    %c1 = arith.constant 1 : index
    %11 = vector.load %arg7[%c12, %c1] : memref<36x324xbf16, #tpu.memory_space<vmem>>, vector<4x323xbf16>
    tpu.vector_store %arg7[%c12, %c1], %10 {strides = array<i32>} : memref<36x324xbf16, #tpu.memory_space<vmem>>, vector<4x323xbf16>,
    %c16 = arith.constant 16 : index
    %c0_5 = arith.constant 0 : index
    %12 = vector.load %arg7[%c16, %c0_5] : memref<36x324xbf16, #tpu.memory_space<vmem>>, vector<4x324xbf16>
    tpu.vector_store %arg7[%c16, %c0_5], %1 {strides = array<i32>} : memref<36x324xbf16, #tpu.memory_space<vmem>>, vector<4x324xbf16>,
    %13 = vector.extract_strided_slice %1 {offsets = [0, 1], sizes = [4, 323], strides = [1, 1]} : vector<4x324xbf16> to vector<4x323xbf16>
    %c20 = arith.constant 20 : index
    %c0_6 = arith.constant 0 : index
    %14 = vector.load %arg7[%c20, %c0_6] : memref<36x324xbf16, #tpu.memory_space<vmem>>, vector<4x323xbf16>
    tpu.vector_store %arg7[%c20, %c0_6], %13 {strides = array<i32>} : memref<36x324xbf16, #tpu.memory_space<vmem>>, vector<4x323xbf16>,
    %15 = vector.extract_strided_slice %1 {offsets = [0, 17], sizes = [4, 307], strides = [1, 1]} : vector<4x324xbf16> to vector<4x307xbf16>
    %c24 = arith.constant 24 : index
    %c0_7 = arith.constant 0 : index
    %16 = vector.load %arg7[%c24, %c0_7] : memref<36x324xbf16, #tpu.memory_space<vmem>>, vector<4x307xbf16>
    tpu.vector_store %arg7[%c24, %c0_7], %15 {strides = array<i32>} : memref<36x324xbf16, #tpu.memory_space<vmem>>, vector<4x307xbf16>,
    %17 = vector.extract_strided_slice %1 {offsets = [0, 18], sizes = [4, 306], strides = [1, 1]} : vector<4x324xbf16> to vector<4x306xbf16>
    %c28 = arith.constant 28 : index
    %c0_8 = arith.constant 0 : index
    %18 = vector.load %arg7[%c28, %c0_8] : memref<36x324xbf16, #tpu.memory_space<vmem>>, vector<4x306xbf16>
    tpu.vector_store %arg7[%c28, %c0_8], %17 {strides = array<i32>} : memref<36x324xbf16, #tpu.memory_space<vmem>>, vector<4x306xbf16>,
    %19 = vector.extract_strided_slice %1 {offsets = [0, 19], sizes = [4, 305], strides = [1, 1]} : vector<4x324xbf16> to vector<4x305xbf16>
    %c32 = arith.constant 32 : index
    %c0_9 = arith.constant 0 : index
    %20 = vector.load %arg7[%c32, %c0_9] : memref<36x324xbf16, #tpu.memory_space<vmem>>, vector<4x305xbf16>
    tpu.vector_store %arg7[%c32, %c0_9], %19 {strides = array<i32>} : memref<36x324xbf16, #tpu.memory_space<vmem>>, vector<4x305xbf16>,
    %c0_10 = arith.constant 0 : index
    %c0_11 = arith.constant 0 : index
    %21 = vector.load %arg2[%c0_10, %c0_11] : memref<8x36xbf16, #tpu.memory_space<vmem>>, vector<8x36xbf16>
    %c0_12 = arith.constant 0 : index
    %c0_13 = arith.constant 0 : index
    %22 = vector.load %arg7[%c0_12, %c0_13] : memref<36x324xbf16, #tpu.memory_space<vmem>>, vector<36x324xbf16>
    %cst_14 = arith.constant dense<0.000000e+00> : vector<8x324xf32>
    %23 = tpu.matmul %21, %22, %cst_14 {dimension_numbers = #tpu.dot_dimension_numbers<[1], [0], [0], [1], [0, 0, 1, 1], [], []>} : vector<8x36xbf16>, vector<36x324xbf16>, vector<8x324xf32> -> vector<8x324xf32>
    %c0_15 = arith.constant 0 : index
    %c0_16 = arith.constant 0 : index
    %24 = vector.load %arg3[%c0_15, %c0_16] : memref<1x324xf32, #tpu.memory_space<vmem>>, vector<1x324xf32>
    %25 = vector.broadcast %24 : vector<1x324xf32> to vector<8x324xf32>
    %26 = arith.mulf %23, %25 : vector<8x324xf32>
    %cst_17 = arith.constant dense<0.000000e+00> : vector<8xf32>
    %27 = vector.multi_reduction <add>, %26, %cst_17 [1] : vector<8x324xf32> to vector<8xf32>
    %28 = vector.shape_cast %27 : vector<8xf32> to vector<8x1xf32>
    %c0_18 = arith.constant 0 : index
    %c0_19 = arith.constant 0 : index
    %c0_20 = arith.constant 0 : index
    %29 = vector.load %arg5[%c0_18, %c0_19, %c0_20] : memref<1x8x1xf32, #tpu.memory_space<vmem>>, vector<1x8x1xf32>
    %30 = vector.shape_cast %29 : vector<1x8x1xf32> to vector<8x1xf32>
    %31 = vector.shape_cast %28 : vector<8x1xf32> to vector<1x8x1xf32>
    tpu.vector_store %arg5[%c0_18, %c0_19, %c0_20], %31 {strides = array<i32>} : memref<1x8x1xf32, #tpu.memory_space<vmem>>, vector<1x8x1xf32>,
    %32 = arith.mulf %26, %23 : vector<8x324xf32>
    %cst_21 = arith.constant dense<0.000000e+00> : vector<8xf32>
    %33 = vector.multi_reduction <add>, %32, %cst_21 [1] : vector<8x324xf32> to vector<8xf32>
    %34 = vector.shape_cast %33 : vector<8xf32> to vector<8x1xf32>
    %c0_22 = arith.constant 0 : index
    %c0_23 = arith.constant 0 : index
    %c0_24 = arith.constant 0 : index
    %35 = vector.load %arg6[%c0_22, %c0_23, %c0_24] : memref<1x8x1xf32, #tpu.memory_space<vmem>>, vector<1x8x1xf32>
    %36 = vector.shape_cast %35 : vector<1x8x1xf32> to vector<8x1xf32>
    %37 = vector.shape_cast %34 : vector<8x1xf32> to vector<1x8x1xf32>
    tpu.vector_store %arg6[%c0_22, %c0_23, %c0_24], %37 {strides = array<i32>} : memref<1x8x1xf32, #tpu.memory_space<vmem>>, vector<1x8x1xf32>,
    %38 = arith.truncf %23 : vector<8x324xf32> to vector<8x324xbf16>
    %c0_25 = arith.constant 0 : index
    %c0_26 = arith.constant 0 : index
    %c0_27 = arith.constant 0 : index
    %39 = vector.load %arg4[%c0_25, %c0_26, %c0_27] : memref<1x8x324xbf16, #tpu.memory_space<vmem>>, vector<1x8x324xbf16>
    %40 = vector.shape_cast %39 : vector<1x8x324xbf16> to vector<8x324xbf16>
    %41 = vector.shape_cast %38 : vector<8x324xbf16> to vector<1x8x324xbf16>
    tpu.vector_store %arg4[%c0_25, %c0_26, %c0_27], %41 {strides = array<i32>} : memref<1x8x324xbf16, #tpu.memory_space<vmem>>, vector<1x8x324xbf16>,
    return
  }
  func.func @transform_0(%arg0: i32) -> (i32, i32, i32) {
    %c0_i32 = arith.constant 0 : i32
    %c0_i32_0 = arith.constant 0 : i32
    %c0_i32_1 = arith.constant 0 : i32
    return %arg0, %c0_i32, %c0_i32_0 : i32, i32, i32
  }
  func.func @transform_1(%arg0: i32) -> (i32, i32) {
    %c0_i32 = arith.constant 0 : i32
    %c0_i32_0 = arith.constant 0 : i32
    %c0_i32_1 = arith.constant 0 : i32
    return %c0_i32, %c0_i32_0 : i32, i32
  }
  func.func @transform_2(%arg0: i32) -> (i32, i32) {
    %c0_i32 = arith.constant 0 : i32
    %c0_i32_0 = arith.constant 0 : i32
    %c0_i32_1 = arith.constant 0 : i32
    return %c0_i32, %c0_i32_0 : i32, i32
  }
  func.func @transform_3(%arg0: i32) -> (i32, i32, i32) {
    %c0_i32 = arith.constant 0 : i32
    %c0_i32_0 = arith.constant 0 : i32
    %c0_i32_1 = arith.constant 0 : i32
    return %arg0, %c0_i32, %c0_i32_0 : i32, i32, i32
  }
  func.func @transform_4(%arg0: i32) -> (i32, i32, i32) {
    %c0_i32 = arith.constant 0 : i32
    %c0_i32_0 = arith.constant 0 : i32
    %c0_i32_1 = arith.constant 0 : i32
    return %arg0, %c0_i32, %c0_i32_0 : i32, i32, i32
  }
  func.func @transform_5(%arg0: i32) -> (i32, i32, i32) {
    %c0_i32 = arith.constant 0 : i32
    %c0_i32_0 = arith.constant 0 : i32
    %c0_i32_1 = arith.constant 0 : i32
    return %arg0, %c0_i32, %c0_i32_0 : i32, i32, i32
  }
}

</mosaic_0001>

<llo_original>
// kernel: simple_dcn_forward.1
$region0: #{simple_dcn_forward.1}
  #allocation0 [shape = 'u32[]', space=smem, size = 0x4, offset = 0x4, fixed_abs, tag = 'smem constant byte address 0x4 - core index']
  #allocation1 [shape = 'u32[144,128]{1,0:T(1,128)}', space=vmem, size = 0x12000, scoped, tag = 'internal scratch']
  #allocation2 [shape = 'bf16[36,324]{1,0:T(8,128)(2,1)}', space=vmem, size = 0x7800, scoped, tag = 'scratch operand']
  %s0 = inlined_call_operand.vmem [shape: bf16[2,4,324], index: 0, kind: input, shape index: {}]
  %s1 = inlined_call_operand.vmem [shape: bf16[8,36], index: 1, kind: input, shape index: {}]
  %s2 = inlined_call_operand.vmem [shape: f32[1,324], index: 2, kind: input, shape index: {}]
  %s3 = inlined_call_operand.vmem [shape: bf16[2,8,324], index: 3, kind: output, shape index: {0}]
  %s4 = inlined_call_operand.vmem [shape: f32[2,8,1], index: 4, kind: output, shape index: {1}]
  %s5 = inlined_call_operand.vmem [shape: f32[2,8,1], index: 5, kind: output, shape index: {2}]
  %6 = xla_tuple %s3, %s4, %s5
  %s7 = sld [smem:[#allocation0]]
  $region61: #{simple_dcn_forward.1} parent=0
    _
  %s9 = ssub.s32 1, %s7
  %s10 = scalar_select 0, %s9, %s7
  loop: start=0, step=1, limit=4
  $region2: #{simple_dcn_forward.1} parent=0 // loop_pre_header
    _
  $region3: #{simple_dcn_forward.1} parent=0 // loop_header
    %s12 = sphi 0, %s16
    %p13 = scmp.ge.s32.totalorder %s12, 4
    %s22 = sphi 0, %s24
    %s25 = sphi 0, %s22
    %s26 = sphi 0, %s25
    %s42 = sphi 0, %s26
    %s46 = sphi 0, %s46
    %s48 = sphi 0, %s46
    %s49 = sphi 0, %s48
    %s63 = sphi 0, %s49
    %s67 = sphi 0, %s67
    %s69 = sphi 0, %s67
    %s70 = sphi 0, %s69
    %s84 = sphi 0, %s70
    %s90 = sphi 0, %s92
    %s93 = sphi 0, %s90
    %s94 = sphi 0, %s93
    %s110 = sphi 0, %s94
    %s116 = sphi 0, %s118
    %s119 = sphi 0, %s116
    %s120 = sphi 0, %s119
    %s136 = sphi 0, %s120
    %s142 = sphi 0, %s144
    %s145 = sphi 0, %s142
    %s146 = sphi 0, %s145
    %s162 = sphi 0, %s146
  $region4: #{simple_dcn_forward.1} parent=0 // loop_header_branch
    %15 = sbr.rel (%p13) target = $region8
  $region5: #{simple_dcn_forward.1} parent=0 // loop_body
    %s17 = ssub.s32 %s12, 1
    %s18 = ssub.s32 %s12, 2
    %s19 = sadd.s32 %s12, 1
    %s20 = ssub.s32 %s12, %s19
    %p21 = scmp.eq.s32.totalorder %s20, 0
    %s23 = sadd.s32 %s22, 1
    %s24 = scalar_select %p21, %s22, %s23
    %p27 = pneg %p21
    %p28 = scmp.eq.s32.totalorder %s12, 1
    %p29 = por %p27, %p28
    %p30 = scmp.ne.s32.totalorder %s22, %s25
    %p31 = scmp.eq.s32.totalorder %s12, 0
    %p32 = por %p30, %p31
    %p33 = scmp.ne.s32.totalorder %s22, %s25
    %p34 = scmp.eq.s32.totalorder %s17, 1
    %p35 = por %p33, %p34
    %p36 = scmp.ne.s32.totalorder %s25, %s26
    %p37 = scmp.eq.s32.totalorder %s17, 0
    %p38 = por %p36, %p37
    %p39 = scmp.ne.s32.totalorder %s25, %s26
    %p40 = scmp.eq.s32.totalorder %s18, 1
    %p41 = por %p39, %p40
    %p43 = scmp.ne.s32.totalorder %s26, %s42
    %p44 = scmp.eq.s32.totalorder %s18, 0
    %p45 = por %p43, %p44
    %s47 = sadd.s32 %s46, 1
    %p50 = scmp.eq.s32.totalorder %s12, 1
    %p51 = scmp.ne.s32.totalorder %s46, %s48
    %p52 = scmp.eq.s32.totalorder %s12, 0
    %p53 = por %p51, %p52
    %p54 = scmp.ne.s32.totalorder %s46, %s48
    %p55 = scmp.eq.s32.totalorder %s17, 1
    %p56 = por %p54, %p55
    %p57 = scmp.ne.s32.totalorder %s48, %s49
    %p58 = scmp.eq.s32.totalorder %s17, 0
    %p59 = por %p57, %p58
    %p60 = scmp.ne.s32.totalorder %s48, %s49
    %p61 = scmp.eq.s32.totalorder %s18, 1
    %p62 = por %p60, %p61
    %p64 = scmp.ne.s32.totalorder %s49, %s63
    %p65 = scmp.eq.s32.totalorder %s18, 0
    %p66 = por %p64, %p65
    %s68 = sadd.s32 %s67, 1
    %p71 = scmp.eq.s32.totalorder %s12, 1
    %p72 = scmp.ne.s32.totalorder %s67, %s69
    %p73 = scmp.eq.s32.totalorder %s12, 0
    %p74 = por %p72, %p73
    %p75 = scmp.ne.s32.totalorder %s67, %s69
    %p76 = scmp.eq.s32.totalorder %s17, 1
    %p77 = por %p75, %p76
    %p78 = scmp.ne.s32.totalorder %s69, %s70
    %p79 = scmp.eq.s32.totalorder %s17, 0
    %p80 = por %p78, %p79
    %p81 = scmp.ne.s32.totalorder %s69, %s70
    %p82 = scmp.eq.s32.totalorder %s18, 1
    %p83 = por %p81, %p82
    %p85 = scmp.ne.s32.totalorder %s70, %s84
    %p86 = scmp.eq.s32.totalorder %s18, 0
    %p87 = por %p85, %p86
    %s88 = ssub.s32 %s12, %s19
    %p89 = scmp.eq.s32.totalorder %s88, 0
    %s91 = sadd.s32 %s90, 1
    %s92 = scalar_select %p89, %s90, %s91
    %p95 = pneg %p89
    %p96 = scmp.eq.s32.totalorder %s12, 1
    %p97 = por %p95, %p96
    %p98 = scmp.ne.s32.totalorder %s90, %s93
    %p99 = scmp.eq.s32.totalorder %s12, 0
    %p100 = por %p98, %p99
    %p101 = scmp.ne.s32.totalorder %s90, %s93
    %p102 = scmp.eq.s32.totalorder %s17, 1
    %p103 = por %p101, %p102
    %p104 = scmp.ne.s32.totalorder %s93, %s94
    %p105 = scmp.eq.s32.totalorder %s17, 0
    %p106 = por %p104, %p105
    %p107 = scmp.ne.s32.totalorder %s93, %s94
    %p108 = scmp.eq.s32.totalorder %s18, 1
    %p109 = por %p107, %p108
    %p111 = scmp.ne.s32.totalorder %s94, %s110
    %p112 = scmp.eq.s32.totalorder %s18, 0
    %p113 = por %p111, %p112
    %s114 = ssub.s32 %s12, %s19
    %p115 = scmp.eq.s32.totalorder %s114, 0
    %s117 = sadd.s32 %s116, 1
    %s118 = scalar_select %p115, %s116, %s117
    %p121 = pneg %p115
    %p122 = scmp.eq.s32.totalorder %s12, 1
    %p123 = por %p121, %p122
    %p124 = scmp.ne.s32.totalorder %s116, %s119
    %p125 = scmp.eq.s32.totalorder %s12, 0
    %p126 = por %p124, %p125
    %p127 = scmp.ne.s32.totalorder %s116, %s119
    %p128 = scmp.eq.s32.totalorder %s17, 1
    %p129 = por %p127, %p128
    %p130 = scmp.ne.s32.totalorder %s119, %s120
    %p131 = scmp.eq.s32.totalorder %s17, 0
    %p132 = por %p130, %p131
    %p133 = scmp.ne.s32.totalorder %s119, %s120
    %p134 = scmp.eq.s32.totalorder %s18, 1
    %p135 = por %p133, %p134
    %p137 = scmp.ne.s32.totalorder %s120, %s136
    %p138 = scmp.eq.s32.totalorder %s18, 0
    %p139 = por %p137, %p138
    %s140 = ssub.s32 %s12, %s19
    %p141 = scmp.eq.s32.totalorder %s140, 0
    %s143 = sadd.s32 %s142, 1
    %s144 = scalar_select %p141, %s142, %s143
    %p147 = pneg %p141
    %p148 = scmp.eq.s32.totalorder %s12, 1
    %p149 = por %p147, %p148
    %p150 = scmp.ne.s32.totalorder %s142, %s145
    %p151 = scmp.eq.s32.totalorder %s12, 0
    %p152 = por %p150, %p151
    %p153 = scmp.ne.s32.totalorder %s142, %s145
    %p154 = scmp.eq.s32.totalorder %s17, 1
    %p155 = por %p153, %p154
    %p156 = scmp.ne.s32.totalorder %s145, %s146
    %p157 = scmp.eq.s32.totalorder %s17, 0
    %p158 = por %p156, %p157
    %p159 = scmp.ne.s32.totalorder %s145, %s146
    %p160 = scmp.eq.s32.totalorder %s18, 1
    %p161 = por %p159, %p160
    %p163 = scmp.ne.s32.totalorder %s146, %s162
    %p164 = scmp.eq.s32.totalorder %s18, 0
    %p165 = por %p163, %p164
    %p166 = scmp.le.s32.totalorder 1, %s12
    %p167 = scmp.lt.s32.totalorder %s12, 3
    %p168 = pnand %p166, %p167
    %p169 = pneg %p168
    // Predicated region
    $region9: #{simple_dcn_forward.1} parent=5 // pred_check
      _
    $region10: #{simple_dcn_forward.1} parent=5 // pred_check_branch
      %171 = sbr.rel (%p168) target = $region12
    $region11: #{simple_dcn_forward.1} parent=5 // pred_region
      %s172 = ssub.s32 %s12, 1
      // Predicated region
      $region13: #{simple_dcn_forward.1} parent=11 // pred_check
        %p173 = pneg %p59
      $region14: #{simple_dcn_forward.1} parent=11 // pred_check_branch
        %175 = sbr.rel (%p173) target = $region16
      $region15: #{simple_dcn_forward.1} parent=11 // pred_region
        _
      $region16: #{simple_dcn_forward.1} parent=11 // pred_fallthru
        _
      // Predicated region
      $region17: #{simple_dcn_forward.1} parent=11 // pred_check
        %p176 = pneg %p80
      $region18: #{simple_dcn_forward.1} parent=11 // pred_check_branch
        %178 = sbr.rel (%p176) target = $region20
      $region19: #{simple_dcn_forward.1} parent=11 // pred_region
        _
      $region20: #{simple_dcn_forward.1} parent=11 // pred_fallthru
        _
    $region12: #{simple_dcn_forward.1} parent=5 // pred_fallthru
      _
    %p179 = scmp.lt.s32.totalorder %s12, 2
    // Predicated region
    $region21: #{simple_dcn_forward.1} parent=5 // pred_check
      %p180 = pneg %p179
    $region22: #{simple_dcn_forward.1} parent=5 // pred_check_branch
      %182 = sbr.rel (%p180) target = $region24
    $region23: #{simple_dcn_forward.1} parent=5 // pred_region
      // Predicated region
      $region25: #{simple_dcn_forward.1} parent=23 // pred_check
        %p183 = pneg %p32
      $region26: #{simple_dcn_forward.1} parent=23 // pred_check_branch
        %185 = sbr.rel (%p183) target = $region28
      $region27: #{simple_dcn_forward.1} parent=23 // pred_region
        %p186 = scmp.lt.s32.totalorder %s12, 1
        %s187 = scalar_select %p186, %s12, 1
        %s188 = smul.addr %s187, 3
        %s189 = smul.addr %s188, 2
        %s190 = scalar_lea.vmem %s0, %s189
      $region28: #{simple_dcn_forward.1} parent=23 // pred_fallthru
        _
    $region24: #{simple_dcn_forward.1} parent=5 // pred_fallthru
      _
    %p191 = scmp.le.s32.totalorder 1, %s12
    %p192 = scmp.lt.s32.totalorder %s12, 3
    %p193 = pnand %p191, %p192
    %p194 = pneg %p193
    // Predicated region
    $region29: #{simple_dcn_forward.1} parent=5 // pred_check
      _
    $region30: #{simple_dcn_forward.1} parent=5 // pred_check_branch
      %196 = sbr.rel (%p193) target = $region32
    $region31: #{simple_dcn_forward.1} parent=5 // pred_region
      %s197 = ssub.s32 %s12, 1
      %p198 = scmp.lt.s32.totalorder %s17, 1
      %s199 = scalar_select %p198, %s17, 1
      %s200 = smul.addr %s199, 3
      %s201 = smul.addr %s200, 2
      %s202 = scalar_lea.vmem %s0, %s201
      %p203 = pneg %p38
      %p204 = pneg %p35
      %p205 = pneg %p59
      %p206 = pneg %p56
      %p207 = pneg %p80
      %p208 = pneg %p77
      %p209 = pneg %p106
      %p210 = pneg %p103
      %p211 = scmp.lt.s32.totalorder %s17, 1
      %s212 = scalar_select %p211, %s17, 1
      %s213 = smul.addr %s212, 3
      %s214 = smul.addr %s213, 4
      %s215 = scalar_lea.vmem %s3, %s214
      %p216 = pneg %p132
      %p217 = pneg %p129
      %p218 = scmp.lt.s32.totalorder %s17, 1
      %s219 = scalar_select %p218, %s17, 1
      %s220 = smul.addr %s219, 8
      %s221 = scalar_lea.vmem %s4, %s220
      %p222 = pneg %p158
      %p223 = pneg %p155
      %p224 = scmp.lt.s32.totalorder %s17, 1
      %s225 = scalar_select %p224, %s17, 1
      %s226 = smul.addr %s225, 8
      %s227 = scalar_lea.vmem %s5, %s226
      %p228 = scmp.lt.s32.totalorder %s17, 1
      %s229 = scalar_select %p228, %s17, 1
      %s230 = smul.addr %s229, 3
      %s231 = smul.addr %s230, 2
      %s232 = scalar_lea.vmem %s0, %s231
      %p233 = scmp.lt.s32.totalorder %s17, 1
      %s234 = scalar_select %p233, %s17, 1
      %s235 = smul.addr %s234, 3
      %s236 = smul.addr %s235, 4
      %s237 = scalar_lea.vmem %s3, %s236
      %p238 = scmp.lt.s32.totalorder %s17, 1
      %s239 = scalar_select %p238, %s17, 1
      %s240 = smul.addr %s239, 8
      %s241 = scalar_lea.vmem %s4, %s240
      %p242 = scmp.lt.s32.totalorder %s17, 1
      %s243 = scalar_select %p242, %s17, 1
      %s244 = smul.addr %s243, 8
      %s245 = scalar_lea.vmem %s5, %s244
      %v247 = vld [vmem:[%s232] sm:$0x3f]
      %248 = vst [vmem:[#allocation2] sm:$0xff] 0
      %vm249 = vcmask 551936
      %250 = vst.msk [vmem:[#allocation2 + $0x8] sm:$0xf] %vm249, 0
      %251 = vst [vmem:[#allocation2 + $0xc] sm:$0xff] 0
      %252 = vst.msk [vmem:[#allocation2 + $0x14] sm:$0xf] %vm249, 0
      %253 = vst [vmem:[#allocation2 + $0x18] sm:$0xff] 0
      %254 = vst.msk [vmem:[#allocation2 + $0x20] sm:$0xf] %vm249, 0
      %255 = vst [vmem:[#allocation2 + $0x24] sm:$0xff] 0
      %256 = vst.msk [vmem:[#allocation2 + $0x2c] sm:$0xf] %vm249, 0
      %257 = vst [vmem:[#allocation2 + $0x30] sm:$0x33] 0
      %vm258 = vcmask 549888
      %259 = vst.msk [vmem:[#allocation2 + $0x38] sm:$0x3] %vm258, 0
      %v261 = vcombine.high %v247, %v247
      %v263 = vunpack.c.l.s4 1983009808
      %v264 = vunpack.c.0.s8 %v263
      %v265 = vlaneseq
      %v266 = vshrl.u32 %v265, 7
      %v267 = vsub.s32 %v264, %v266
      %v268 = vrot.slane %v247, %v267
      %v270 = vunpack.c.l.s4 1983009808
      %v271 = vunpack.c.0.s8 %v270
      %v272 = vlaneseq
      %v273 = vshrl.u32 %v272, 7
      %v274 = vsub.s32 %v271, %v273
      %v275 = vrot.slane %v261, %v274
      %276 = vrot.lane.b32.xlu0 %v268, 19
      %v277 = vpop.permute.xlu0 %276
      %278 = vrot.lane.b32.xlu0 %v275, 19
      %v279 = vpop.permute.xlu0 %278
      %v280 = vrot.slane %v277, 4
      %vm281 = vcmask 154624
      %v282 = vsel %vm281, %v280, %v277
      %v283 = vsel %vm281, %v280, %v279
      %vm286 = vcmask 1041560
      %vm287 = vcmask 1045508
      %vm288 = vmor %vm287, %vm286
      %289 = vst.msk [vmem:[#allocation2] sm:$0x33] %vm288, %v282
      %290 = vst.msk [vmem:[#allocation2 + $0x8] sm:$0x3] %vm258, %v283
      %v291 = vcombine.low %v247, %v247
      %v293 = vunpack.c.l.s4 1983009808
      %v294 = vunpack.c.0.s8 %v293
      %v295 = vlaneseq
      %v296 = vshrl.u32 %v295, 7
      %v297 = vsub.s32 %v294, %v296
      %v298 = vrot.slane %v291, %v297
      %299 = vrot.lane.b32.xlu0 %v298, 18
      %v300 = vpop.permute.xlu0 %299
      %301 = vrot.lane.b32.xlu0 %v268, 18
      %v302 = vpop.permute.xlu0 %301
      %v303 = vrot.slane %v300, 4
      %vm304 = vcmask 146432
      %v305 = vsel %vm304, %v303, %v300
      %v306 = vsel %vm304, %v303, %v302
      %vm309 = vcmask 1043602
      %vm310 = vcmask 1047558
      %vm311 = vmor %vm310, %vm309
      %312 = vst.msk [vmem:[#allocation2] sm:$0xcc] %vm311, %v305
      %vm313 = vcmask 551938
      %314 = vst.msk [vmem:[#allocation2 + $0x8] sm:$0xc] %vm313, %v306
      %315 = vrot.lane.b32.xlu0 %v268, 17
      %v316 = vpop.permute.xlu0 %315
      %317 = vrot.lane.b32.xlu0 %v275, 17
      %v318 = vpop.permute.xlu0 %317
      %v319 = vrot.slane %v316, 4
      %vm320 = vcmask 138240
      %v321 = vsel %vm320, %v319, %v316
      %v322 = vsel %vm320, %v319, %v318
      %vm325 = vcmask 1041544
      %vm326 = vmor %vm287, %vm325
      %327 = vst.msk [vmem:[#allocation2 + $0xc] sm:$0x33] %vm326, %v321
      %328 = vst.msk [vmem:[#allocation2 + $0x14] sm:$0x3] %vm258, %v322
      %329 = vrot.lane.b32.xlu0 %v298, 1
      %v330 = vpop.permute.xlu0 %329
      %331 = vrot.lane.b32.xlu0 %v268, 1
      %v332 = vpop.permute.xlu0 %331
      %v333 = vrot.slane %v330, 4
      %vm334 = vcmask 7168
      %v335 = vsel %vm334, %v333, %v330
      %v336 = vsel %vm334, %v333, %v332
      %vm339 = vcmask 1043466
      %vm340 = vmor %vm310, %vm339
      %341 = vst.msk [vmem:[#allocation2 + $0xc] sm:$0xcc] %vm340, %v335
      %342 = vst.msk [vmem:[#allocation2 + $0x14] sm:$0xc] %vm313, %v336
      %345 = vst [vmem:[#allocation2 + $0x18] sm:$0x33] %v268
      %346 = vst.msk [vmem:[#allocation2 + $0x20] sm:$0x3] %vm258, %v275
      %347 = vrot.lane.b32.xlu0 %v298, 127
      %v348 = vpop.permute.xlu0 %347
      %349 = vrot.lane.b32.xlu0 %v268, 127
      %v350 = vpop.permute.xlu0 %349
      %v351 = vrot.slane %v348, 4
      %v352 = vrot.slane %v350, 4
      %vm353 = vcmask 1043456
      %v354 = vsel %vm353, %v351, %v352
      %vm355 = vcmask 1039360
      %v356 = vsel %vm355, %v348, %v354
      %359 = vst [vmem:[#allocation2 + $0x18] sm:$0xcc] %v356
      %vm360 = vcmask 543746
      %361 = vst.msk [vmem:[#allocation2 + $0x20] sm:$0xc] %vm360, %v350
      %362 = vrot.lane.b32.xlu0 %v268, 111
      %v363 = vpop.permute.xlu0 %362
      %364 = vrot.lane.b32.xlu0 %v275, 111
      %v365 = vpop.permute.xlu0 %364
      %v366 = vrot.slane %v363, 4
      %v367 = vrot.slane %v365, 4
      %v368 = vsel %vm353, %v366, %v367
      %vm369 = vcmask 908288
      %v370 = vsel %vm369, %v363, %v368
      %373 = vst [vmem:[#allocation2 + $0x24] sm:$0x33] %v370
      %vm374 = vcmask 410624
      %375 = vst.msk [vmem:[#allocation2 + $0x2c] sm:$0x3] %vm374, %v365
      %376 = vrot.lane.b32.xlu0 %v298, 110
      %v377 = vpop.permute.xlu0 %376
      %378 = vrot.lane.b32.xlu0 %v268, 110
      %v379 = vpop.permute.xlu0 %378
      %v380 = vrot.slane %v377, 4
      %v381 = vrot.slane %v379, 4
      %v382 = vsel %vm353, %v380, %v381
      %vm383 = vcmask 900096
      %v384 = vsel %vm383, %v377, %v382
      %387 = vst [vmem:[#allocation2 + $0x24] sm:$0xcc] %v384
      %vm388 = vcmask 404482
      %389 = vst.msk [vmem:[#allocation2 + $0x2c] sm:$0xc] %vm388, %v379
      %390 = vrot.lane.b32.xlu0 %v268, 109
      %v391 = vpop.permute.xlu0 %390
      %392 = vrot.lane.b32.xlu0 %v275, 109
      %v393 = vpop.permute.xlu0 %392
      %v394 = vrot.slane %v391, 4
      %v395 = vrot.slane %v393, 4
      %v396 = vsel %vm353, %v394, %v395
      %vm397 = vcmask 891904
      %v398 = vsel %vm397, %v391, %v396
      %401 = vst [vmem:[#allocation2 + $0x30] sm:$0x33] %v398
      %vm402 = vcmask 394240
      %403 = vst.msk [vmem:[#allocation2 + $0x38] sm:$0x3] %vm402, %v393
      %v404 = vld [vmem:[%s1] sm:$0xf]
      %v405 = vld [vmem:[#allocation2] sm:$0xff]
      %v406 = vld [vmem:[#allocation2 + $0x8] sm:$0xf]
      %v407 = vld [vmem:[#allocation2 + $0xc] sm:$0xff]
      %v408 = vld [vmem:[#allocation2 + $0x14] sm:$0xf]
      %v409 = vld [vmem:[#allocation2 + $0x18] sm:$0xff]
      %v410 = vld [vmem:[#allocation2 + $0x20] sm:$0xf]
      %v411 = vld [vmem:[#allocation2 + $0x24] sm:$0xff]
      %v412 = vld [vmem:[#allocation2 + $0x2c] sm:$0xf]
      %v413 = vld [vmem:[#allocation2 + $0x30] sm:$0x33]
      %v414 = vld [vmem:[#allocation2 + $0x38] sm:$0x3]
      %v425 = vunpack.c.l.b16 %v405
      %v426 = vunpack.c.h.b16 %v405
      %v427 = vunpack.c.l.b16 %v406
      %v428 = vunpack.c.l.b16 %v407
      %v429 = vunpack.c.h.b16 %v407
      %v430 = vunpack.c.l.b16 %v408
      %v431 = vunpack.c.l.b16 %v409
      %v432 = vunpack.c.h.b16 %v409
      %v433 = vunpack.c.l.b16 %v410
      %v434 = vunpack.c.l.b16 %v411
      %v435 = vunpack.c.h.b16 %v411
      %v436 = vunpack.c.l.b16 %v412
      %v437 = vunpack.c.l.b16 %v413
      %v438 = vunpack.c.h.b16 %v413
      %v439 = vunpack.c.l.b16 %v414
      %v440 = vpack.c.b16 %v428, %v425
      %v441 = vpack.c.b16 %v429, %v426
      %v442 = vpack.c.b16 %v430, %v427
      %v443 = vpack.c.b16 %v434, %v431
      %v444 = vpack.c.b16 %v435, %v432
      %v445 = vpack.c.b16 %v436, %v433
      %v446 = vpack.c.b16 %v437, %v437
      %v447 = vpack.c.b16 %v438, %v438
      %v448 = vpack.c.b16 %v439, %v439
      %vm455 = vcmask 293888
      %v457 = vsel %vm455, %v404, 0
      %vm459 = vcmask 1041408
      %v461 = vsel %vm459, %v446, 0
      %v464 = vsel %vm459, %v447, 0
      %v467 = vsel %vm459, %v448, 0
      %469 = vmatprep.subr.bf16.mxu0 %v441
      %470 = vmatpush1.bf16.msra.mxu0 %v440
      %471 = vmatprep.subr.bf16.mxu0 %v444
      %472 = vmatpush1.bf16.msra.mxu0 %v443
      %473 = vmatprep.subr.bf16.mxu0 %v464
      %474 = vmatpush1.bf16.msra.mxu0 %v461
      %475 = vmatprep.subr.bf16.mxu0 0
      %476 = vmatpush1.bf16.msra.mxu0 0
      %477 = vmatprep.subr.bf16.mxu0 0
      %478 = vmatpush1.bf16.msra.mxu0 0
      %479 = vmatprep.subr.bf16.mxu0 0
      %480 = vmatpush1.bf16.msra.mxu0 0
      %481 = vmatprep.subr.bf16.mxu0 0
      %482 = vmatpush1.bf16.msra.mxu0 0
      %483 = vmatprep.subr.bf16.mxu0 0
      %484 = vmatpush1.bf16.msra.mxu0 0
      %485 = vmatprep.subr.bf16.mxu0 0
      %486 = vmatpush1.bf16.msra.mxu0 0
      %487 = vmatprep.subr.bf16.mxu0 0
      %488 = vmatpush1.bf16.msra.mxu0 0
      %489 = vmatprep.subr.bf16.mxu0 0
      %490 = vmatpush1.bf16.msra.mxu0 0
      %491 = vmatprep.subr.bf16.mxu0 0
      %492 = vmatpush1.bf16.msra.mxu0 0
      %493 = vmatprep.subr.bf16.mxu0 0
      %494 = vmatpush1.bf16.msra.mxu0 0
      %495 = vmatprep.subr.bf16.mxu0 0
      %496 = vmatpush1.bf16.msra.mxu0 0
      %497 = vmatprep.subr.bf16.mxu0 0
      %498 = vmatpush1.bf16.msra.mxu0 0
      %499 = vmatprep.subr.bf16.mxu0 0
      %500 = vmatpush1.bf16.msra.mxu0 0
      %501 = vmatprep.mubr.bf16.mxu0 0
      %502 = vmatmul.mubr.bf16.gmra.mrb[0].mxu0 %v457
      %v503 = vpop.f32.mrb[0].mxu0
      %v504 = vadd.f32 0.0, %v503
      %v505 = vpop.f32.mrb[0].mxu0
      %v506 = vadd.f32 0.0, %v505
      %v507 = vpop.f32.mrb[0].mxu0
      %v508 = vpop.f32.mrb[0].mxu0
      %509 = vdwg.mxu0
      %510 = vmatprep.subr.bf16.mxu0 0
      %511 = vmatpush1.bf16.msra.mxu0 %v442
      %512 = vmatprep.subr.bf16.mxu0 0
      %513 = vmatpush1.bf16.msra.mxu0 %v445
      %514 = vmatprep.subr.bf16.mxu0 0
      %515 = vmatpush1.bf16.msra.mxu0 %v467
      %516 = vmatprep.subr.bf16.mxu0 0
      %517 = vmatpush1.bf16.msra.mxu0 0
      %518 = vmatprep.subr.bf16.mxu0 0
      %519 = vmatpush1.bf16.msra.mxu0 0
      %520 = vmatprep.subr.bf16.mxu0 0
      %521 = vmatpush1.bf16.msra.mxu0 0
      %522 = vmatprep.subr.bf16.mxu0 0
      %523 = vmatpush1.bf16.msra.mxu0 0
      %524 = vmatprep.subr.bf16.mxu0 0
      %525 = vmatpush1.bf16.msra.mxu0 0
      %526 = vmatprep.subr.bf16.mxu0 0
      %527 = vmatpush1.bf16.msra.mxu0 0
      %528 = vmatprep.subr.bf16.mxu0 0
      %529 = vmatpush1.bf16.msra.mxu0 0
      %530 = vmatprep.subr.bf16.mxu0 0
      %531 = vmatpush1.bf16.msra.mxu0 0
      %532 = vmatprep.subr.bf16.mxu0 0
      %533 = vmatpush1.bf16.msra.mxu0 0
      %534 = vmatprep.subr.bf16.mxu0 0
      %535 = vmatpush1.bf16.msra.mxu0 0
      %536 = vmatprep.subr.bf16.mxu0 0
      %537 = vmatpush1.bf16.msra.mxu0 0
      %538 = vmatprep.subr.bf16.mxu0 0
      %539 = vmatpush1.bf16.msra.mxu0 0
      %540 = vmatprep.subr.bf16.mxu0 0
      %541 = vmatpush1.bf16.msra.mxu0 0
      %542 = vmatprep.mubr.bf16.mxu0 0
      %543 = vmatmul.mubr.bf16.gmra.mrb[0].mxu0 %v457
      %v544 = vpop.f32.mrb[0].mxu0
      %v545 = vadd.f32 0.0, %v544
      %v546 = vpop.f32.mrb[0].mxu0
      %v547 = vpop.f32.mrb[0].mxu0
      %v548 = vpop.f32.mrb[0].mxu0
      %549 = vdwg.mxu0
      %v550 = vld [vmem:[%s2] sm:$0x7]
      %v552 = vlaneseq
      %v553 = vshrl.u32 %v552, 7
      %v554 = vsub.s32 0, %v553
      %v555 = vrot.slane %v550, %v554
      %v556 = vlaneseq
      %v557 = vshrl.u32 %v556, 7
      %v558 = vsub.s32 1, %v557
      %v559 = vrot.slane %v550, %v558
      %v560 = vlaneseq
      %v561 = vshrl.u32 %v560, 7
      %v562 = vsub.s32 2, %v561
      %v563 = vrot.slane %v550, %v562
      %v567 = vmul.f32 %v504, %v555
      %v568 = vmul.f32 %v506, %v559
      %v569 = vmul.f32 %v545, %v563
      %v570 = vadd.f32 %v567, %v568
      %vm571 = vcmask 556032
      %v572 = vsel %vm571, %v569, 0.0
      %v573 = vadd.f32 %v570, %v572
      %574 = vadd.xlane.f32.xlu0 %v573
      %v575 = vpop.xlane.xlu0 %574
      %vm576 = vcmask 7168
      %577 = vst.msk [vmem:[%s241] sm:$0xff] %vm576, %v575
      %v578 = vmul.f32 %v567, %v504
      %v579 = vmul.f32 %v568, %v506
      %v580 = vmul.f32 %v569, %v545
      %v581 = vadd.f32 %v578, %v579
      %v582 = vsel %vm571, %v580, 0.0
      %v583 = vadd.f32 %v581, %v582
      %584 = vadd.xlane.f32.xlu0 %v583
      %v585 = vpop.xlane.xlu0 %584
      %586 = vst.msk [vmem:[%s245] sm:$0xff] %vm576, %v585
      %v587 = vpack.c.bf16 %v504, %v504
      %v588 = vpack.c.bf16 %v506, %v506
      %v589 = vpack.c.bf16 %v545, %v545
      %v593 = vunpack.c.l.b16 %v587
      %v594 = vunpack.c.l.b16 %v588
      %v595 = vunpack.c.l.b16 %v589
      %v596 = vpack.c.b16 %v594, %v593
      %v597 = vpack.c.b16 %v595, %v595
      %600 = vst [vmem:[%s237] sm:$0xff] %v596
      %601 = vst.msk [vmem:[%s237 + $0x8] sm:$0xf] %vm249, %v597
      %p602 = scmp.lt.s32.totalorder %s17, 1
      %s603 = scalar_select %p602, %s17, 1
      %s604 = smul.addr %s603, 3
      %s605 = smul.addr %s604, 4
      %s606 = scalar_lea.vmem %s3, %s605
      %p607 = scmp.lt.s32.totalorder %s17, 1
      %s608 = scalar_select %p607, %s17, 1
      %s609 = smul.addr %s608, 8
      %s610 = scalar_lea.vmem %s4, %s609
      %p611 = scmp.lt.s32.totalorder %s17, 1
      %s612 = scalar_select %p611, %s17, 1
      %s613 = smul.addr %s612, 8
      %s614 = scalar_lea.vmem %s5, %s613
      // Predicated region
      $region33: #{simple_dcn_forward.1} parent=31 // pred_check
        %p615 = pneg %p103
      $region34: #{simple_dcn_forward.1} parent=31 // pred_check_branch
        %617 = sbr.rel (%p615) target = $region36
      $region35: #{simple_dcn_forward.1} parent=31 // pred_region
        _
      $region36: #{simple_dcn_forward.1} parent=31 // pred_fallthru
        _
      // Predicated region
      $region37: #{simple_dcn_forward.1} parent=31 // pred_check
        %p618 = pneg %p129
      $region38: #{simple_dcn_forward.1} parent=31 // pred_check_branch
        %620 = sbr.rel (%p618) target = $region40
      $region39: #{simple_dcn_forward.1} parent=31 // pred_region
        _
      $region40: #{simple_dcn_forward.1} parent=31 // pred_fallthru
        _
      // Predicated region
      $region41: #{simple_dcn_forward.1} parent=31 // pred_check
        %p621 = pneg %p155
      $region42: #{simple_dcn_forward.1} parent=31 // pred_check_branch
        %623 = sbr.rel (%p621) target = $region44
      $region43: #{simple_dcn_forward.1} parent=31 // pred_region
        _
      $region44: #{simple_dcn_forward.1} parent=31 // pred_fallthru
        _
    $region32: #{simple_dcn_forward.1} parent=5 // pred_fallthru
      _
    %p624 = scmp.le.s32.totalorder 2, %s12
    // Predicated region
    $region45: #{simple_dcn_forward.1} parent=5 // pred_check
      %p625 = pneg %p624
    $region46: #{simple_dcn_forward.1} parent=5 // pred_check_branch
      %627 = sbr.rel (%p625) target = $region48
    $region47: #{simple_dcn_forward.1} parent=5 // pred_region
      %s628 = ssub.s32 %s12, 2
      // Predicated region
      $region49: #{simple_dcn_forward.1} parent=47 // pred_check
        %p629 = pneg %p109
      $region50: #{simple_dcn_forward.1} parent=47 // pred_check_branch
        %631 = sbr.rel (%p629) target = $region52
      $region51: #{simple_dcn_forward.1} parent=47 // pred_region
        %p632 = scmp.lt.s32.totalorder %s18, 1
        %s633 = scalar_select %p632, %s18, 1
        %s634 = smul.addr %s633, 3
        %s635 = smul.addr %s634, 4
        %s636 = scalar_lea.vmem %s3, %s635
      $region52: #{simple_dcn_forward.1} parent=47 // pred_fallthru
        _
      // Predicated region
      $region53: #{simple_dcn_forward.1} parent=47 // pred_check
        %p637 = pneg %p135
      $region54: #{simple_dcn_forward.1} parent=47 // pred_check_branch
        %639 = sbr.rel (%p637) target = $region56
      $region55: #{simple_dcn_forward.1} parent=47 // pred_region
        %p640 = scmp.lt.s32.totalorder %s18, 1
        %s641 = scalar_select %p640, %s18, 1
        %s642 = smul.addr %s641, 8
        %s643 = scalar_lea.vmem %s4, %s642
      $region56: #{simple_dcn_forward.1} parent=47 // pred_fallthru
        _
      // Predicated region
      $region57: #{simple_dcn_forward.1} parent=47 // pred_check
        %p644 = pneg %p161
      $region58: #{simple_dcn_forward.1} parent=47 // pred_check_branch
        %646 = sbr.rel (%p644) target = $region60
      $region59: #{simple_dcn_forward.1} parent=47 // pred_region
        %p647 = scmp.lt.s32.totalorder %s18, 1
        %s648 = scalar_select %p647, %s18, 1
        %s649 = smul.addr %s648, 8
        %s650 = scalar_lea.vmem %s5, %s649
      $region60: #{simple_dcn_forward.1} parent=47 // pred_fallthru
        _
    $region48: #{simple_dcn_forward.1} parent=5 // pred_fallthru
      _
  $region6: #{simple_dcn_forward.1} parent=0 // loop_footer
    %s16 = sadd.s32 1, %s12
  $region7: #{simple_dcn_forward.1} parent=0 // loop_footer_branch
    %11 = sbr.rel target = $region3
  $region8: #{simple_dcn_forward.1} parent=0 // loop_exit
    _

</llo_original>
